<compile_context>
chip_gen: v7x
topology: tpu7x:2x2x1
jax: 0.10.0
libtpu: 0.0.40
codegen_flags: <defaults>
</compile_context>

<pallas_src>
import jax
import jax.numpy as jnp
from jax import lax
from jax.experimental import pallas as pl
from jax.experimental.pallas import tpu as pltpu

C_OUT = 256      # proj output channels == feature channel count required by forward
CLIP_DIM = 512   # CLIP ViT-B/32 embedding dim


def _cross_model_att_kernel(op_ref, col_ref, feat_ref, out_ref):
    # op_ref:   (Bt, 2, C)   rows  [ones ; p_b]                      (f32)
    # col_ref:  (Bt, C, 2)   cols  [gamma*rowmax_b , gamma*HW*p_b]   (f32)
    # feat_ref / out_ref: (Bt, C, HWblk), feature dtype
    bt = feat_ref.shape[0]

    def body(bi, carry):
        v = feat_ref[bi].astype(jnp.float32)                              # (C, HWblk)
        # One MXU call produces both reductions:
        #   st[0] = sum_c v[c, :]   (column sum)      st[1] = p_b @ v
        st = jnp.dot(op_ref[bi], v, preferred_element_type=jnp.float32)   # (2, HWblk)
        s = st[0:1, :]                                                     # (1, HWblk)
        t = st[1:2, :]                                                     # (1, HWblk)
        cols = col_ref[bi]                                                 # (C, 2)
        a = cols[:, 0:1]                                                   # (C,1) gamma*rowmax
        c = cols[:, 1:2]                                                   # (C,1) gamma*HW*p
        # out = gamma*(rowmax (outer) s - HW*p (outer) t) + v   (gamma pre-folded)
        out_ref[bi] = (a * s - c * t + v).astype(out_ref.dtype)
        return carry

    lax.fori_loop(0, bt, body, 0, unroll=True)


def _pick_tiles(B, C, HW, in_bytes, out_bytes):
    """Largest batch/HW tile whose double-buffered blocks fit the most restrictive
    default scoped-VMEM budget (16 MiB on v5e; v6e/v7x default to 32 MiB)."""
    budget = 12 * 1024 * 1024

    def vmem_use(bt, hw_blk):
        feat = 2 * bt * C * hw_blk * (in_bytes + out_bytes)   # in+out tiles, 2x buffered
        aux = 2 * bt * (C * 128 + 8 * C) * 4                  # lane/sublane-padded (Bt,C,2)+(Bt,2,C)
        return feat + aux

    # HW block: full HW if it fits at Bt=1, else the largest divisor of HW that is
    # a multiple of 128 lanes (lane-dense DMAs) and fits.
    hw_blk = HW
    if vmem_use(1, hw_blk) > budget:
        d = HW
        while d > 0:
            if HW % d == 0 and d % 128 == 0 and vmem_use(1, d) <= budget:
                hw_blk = d
                break
            d -= 1

    # Batch tile: largest divisor of B that fits (amortizes ~0.35us grid-step overhead).
    bt = 1
    for cand in range(min(B, 16), 0, -1):
        if B % cand == 0 and vmem_use(cand, hw_blk) <= budget:
            bt = cand
            break

    # Keep >= 2 grid steps so both v7x TensorCores get work and the pipeline can
    # overlap DMA with compute.  Splitting HW is algebraically free: s, t and the
    # rank-1 outer products are column-independent.
    if (B // bt) * (HW // hw_blk) < 2 and hw_blk % 256 == 0:
        hw_blk //= 2
    return bt, hw_blk


def cross_model_att(clip_feat, feature, w, b, gamma):
    """clip_feat: (B, 512) pre-encoded CLIP image features; feature: (B, C, H, W)."""
    B, C, H, W = feature.shape
    HW = H * W
    assert C == C_OUT, f"proj maps {CLIP_DIM}->{C_OUT}; feature must have {C_OUT} channels"
    assert clip_feat.shape == (B, CLIP_DIM)

    # ---- tiny O(B*C) prep as plain XLA ops (projection, rowmax, gamma folding) ----
    p = (clip_feat.astype(jnp.float32) @ w.astype(jnp.float32)
         + b.reshape(1, C).astype(jnp.float32))                           # (B, C)
    pmax = jnp.max(p, axis=-1, keepdims=True)                             # (B, 1)
    pmin = jnp.min(p, axis=-1, keepdims=True)                             # (B, 1)
    rowmax = float(HW) * jnp.maximum(p * pmax, p * pmin)                  # (B, C)
    g = jnp.asarray(gamma, jnp.float32).reshape(())
    # Column operands of the rank-1 update, gamma pre-folded (exact by linearity).
    colmat = jnp.stack([g * rowmax, (g * float(HW)) * p], axis=-1)        # (B, C, 2)
    # Row operands: [ones ; p] so one MXU dot yields colsum(v) and p@v together.
    opmat = jnp.concatenate(
        [jnp.ones((B, 1, C), jnp.float32), p[:, None, :]], axis=1)        # (B, 2, C)

    # Feature stays in its native dtype on the DMA path; upcast only in-kernel.
    feat_flat = feature.reshape(B, C, HW)
    elem_bytes = feature.dtype.itemsize
    Bt, hw_blk = _pick_tiles(B, C, HW, elem_bytes, elem_bytes)
    grid = (B // Bt, HW // hw_blk)

    out = pl.pallas_call(
        _cross_model_att_kernel,
        out_shape=jax.ShapeDtypeStruct((B, C, HW), feature.dtype),
        grid_spec=pltpu.PrefetchScalarGridSpec(
            num_scalar_prefetch=0,
            grid=grid,
            in_specs=[
                pl.BlockSpec((Bt, 2, C), lambda i, j: (i, 0, 0)),        # [ones; p] rows
                pl.BlockSpec((Bt, C, 2), lambda i, j: (i, 0, 0)),        # gamma-folded columns
                pl.BlockSpec((Bt, C, hw_blk), lambda i, j: (i, 0, j)),   # feature tile
            ],
            out_specs=pl.BlockSpec((Bt, C, hw_blk), lambda i, j: (i, 0, j)),
        ),
        compiler_params=pltpu.CompilerParams(
            dimension_semantics=("parallel", "parallel"),
            vmem_limit_bytes=32 * 1024 * 1024),
    )(opmat, colmat, feat_flat)
    return out.reshape(B, C, H, W)


def reference(clip_feat, feature, w, b, gamma):
    """Plain-JAX reference matching the PyTorch forward (post CLIP encode)."""
    B, C, H, W = feature.shape
    clip_p = clip_feat @ w + b                                            # (B, C)
    q = jnp.broadcast_to(clip_p[:, :, None], (B, C, H * W))
    k = jnp.transpose(q, (0, 2, 1))
    per = jnp.einsum('bcp,bpd->bcd', q, k)
    per = jnp.max(per, axis=-1, keepdims=True) - per
    v = feature.reshape(B, C, H * W)
    info = jnp.einsum('bcd,bdp->bcp', per, v)
    return (gamma * info + v).reshape(B, C, H, W)


if __name__ == "__main__":
    key = jax.random.PRNGKey(0)
    k1, k2, k3, k4 = jax.random.split(key, 4)

    # feature channels must equal 256 because proj maps CLIP(512) -> 256.
    B, C, H, W = 2, 256, 16, 16

    # TODO(synk): CLIP ViT-B/32 encode_image + torchvision Resize(224) have no
    # Pallas equivalent; the kernel consumes pre-encoded (B, 512) CLIP features.
    clip_feat = jax.random.normal(k1, (B, CLIP_DIM), jnp.float32)
    feature = jax.random.normal(k2, (B, C, H, W), jnp.float32)

    # nn.Linear(512, 256) params, deterministic synthetic init.
    w = jax.random.normal(k3, (CLIP_DIM, C_OUT), jnp.float32) / jnp.sqrt(CLIP_DIM)
    b = jax.random.normal(k4, (C_OUT,), jnp.float32) * 0.01

    # gamma is nn.Parameter(torch.zeros(1)) in __init__; use a nonzero value so
    # the attention branch is actually exercised.
    gamma = jnp.float32(0.1)

    # note: self.conv (1x1 Conv2d) and self.softmax are defined in __init__ but
    # never used in forward, so they are omitted.

    out = jax.block_until_ready(cross_model_att(clip_feat, feature, w, b, gamma))

    ref = reference(clip_feat, feature, w, b, gamma)
    rel_err = jnp.max(jnp.abs(out - ref)) / (jnp.max(jnp.abs(ref)) + 1e-6)
    assert out.shape == (B, C, H, W)
    assert rel_err < 1e-3, f"mismatch: rel err {rel_err}"
    print("KERNEL_OK")
</pallas_src>

<mosaic_0001>
module attributes {stable_mosaic.version = 11 : i64} {
  func.func @_cross_model_att_kernel(%arg0: i32, %arg1: i32, %arg2: memref<2x2x256xf32, #tpu.memory_space<vmem>>, %arg3: memref<2x256x2xf32, #tpu.memory_space<vmem>>, %arg4: memref<2x256x128xf32, #tpu.memory_space<vmem>>, %arg5: memref<2x256x128xf32, #tpu.memory_space<vmem>>) attributes {dimension_semantics = [#tpu.dimension_semantics<parallel>, #tpu.dimension_semantics<parallel>], iteration_bounds = array<i64: 1, 2>, scalar_prefetch = 0 : i64, scratch_operands = 0 : i64, tpu.core_type = #tpu.core_type<tc>, window_params = [{transform_indices = @transform_0, window_bounds = array<i64: 2, 2, 256>}, {transform_indices = @transform_1, window_bounds = array<i64: 2, 256, 2>}, {transform_indices = @transform_2, window_bounds = array<i64: 2, 256, 128>}, {transform_indices = @transform_3, window_bounds = array<i64: 2, 256, 128>}]} {
    %c0_i32 = arith.constant 0 : i32
    %0 = arith.index_cast %c0_i32 : i32 to index
    %c0 = arith.constant 0 : index
    %c0_0 = arith.constant 0 : index
    %1 = vector.load %arg4[%0, %c0, %c0_0] : memref<2x256x128xf32, #tpu.memory_space<vmem>>, vector<1x256x128xf32>
    %2 = vector.shape_cast %1 : vector<1x256x128xf32> to vector<256x128xf32>
    %3 = arith.index_cast %c0_i32 : i32 to index
    %c0_1 = arith.constant 0 : index
    %c0_2 = arith.constant 0 : index
    %4 = vector.load %arg2[%3, %c0_1, %c0_2] : memref<2x2x256xf32, #tpu.memory_space<vmem>>, vector<1x2x256xf32>
    %5 = vector.shape_cast %4 : vector<1x2x256xf32> to vector<2x256xf32>
    %cst = arith.constant dense<0.000000e+00> : vector<2x128xf32>
    %6 = tpu.matmul %5, %2, %cst {dimension_numbers = #tpu.dot_dimension_numbers<[1], [0], [0], [1], [0, 0, 1, 1], [], []>} : vector<2x256xf32>, vector<256x128xf32>, vector<2x128xf32> -> vector<2x128xf32>
    %7 = vector.extract_strided_slice %6 {offsets = [0, 0], sizes = [1, 128], strides = [1, 1]} : vector<2x128xf32> to vector<1x128xf32>
    %8 = vector.extract_strided_slice %6 {offsets = [1, 0], sizes = [1, 128], strides = [1, 1]} : vector<2x128xf32> to vector<1x128xf32>
    %9 = arith.index_cast %c0_i32 : i32 to index
    %c0_3 = arith.constant 0 : index
    %c0_4 = arith.constant 0 : index
    %10 = vector.load %arg3[%9, %c0_3, %c0_4] : memref<2x256x2xf32, #tpu.memory_space<vmem>>, vector<1x256x2xf32>
    %11 = vector.shape_cast %10 : vector<1x256x2xf32> to vector<256x2xf32>
    %12 = vector.extract_strided_slice %11 {offsets = [0, 0], sizes = [256, 1], strides = [1, 1]} : vector<256x2xf32> to vector<256x1xf32>
    %13 = vector.extract_strided_slice %11 {offsets = [0, 1], sizes = [256, 1], strides = [1, 1]} : vector<256x2xf32> to vector<256x1xf32>
    %14 = vector.broadcast %12 : vector<256x1xf32> to vector<256x128xf32>
    %15 = vector.broadcast %7 : vector<1x128xf32> to vector<256x128xf32>
    %16 = arith.mulf %14, %15 : vector<256x128xf32>
    %17 = vector.broadcast %13 : vector<256x1xf32> to vector<256x128xf32>
    %18 = vector.broadcast %8 : vector<1x128xf32> to vector<256x128xf32>
    %19 = arith.mulf %17, %18 : vector<256x128xf32>
    %20 = arith.subf %16, %19 : vector<256x128xf32>
    %21 = arith.addf %20, %2 : vector<256x128xf32>
    %22 = arith.index_cast %c0_i32 : i32 to index
    %c0_5 = arith.constant 0 : index
    %c0_6 = arith.constant 0 : index
    %23 = vector.load %arg5[%22, %c0_5, %c0_6] : memref<2x256x128xf32, #tpu.memory_space<vmem>>, vector<1x256x128xf32>
    %24 = vector.shape_cast %23 : vector<1x256x128xf32> to vector<256x128xf32>
    %25 = vector.shape_cast %21 : vector<256x128xf32> to vector<1x256x128xf32>
    tpu.vector_store %arg5[%22, %c0_5, %c0_6], %25 {strides = array<i32>} : memref<2x256x128xf32, #tpu.memory_space<vmem>>, vector<1x256x128xf32>,
    %c1_i32 = arith.constant 1 : i32
    %26 = arith.index_cast %c1_i32 : i32 to index
    %c0_7 = arith.constant 0 : index
    %c0_8 = arith.constant 0 : index
    %27 = vector.load %arg4[%26, %c0_7, %c0_8] : memref<2x256x128xf32, #tpu.memory_space<vmem>>, vector<1x256x128xf32>
    %28 = vector.shape_cast %27 : vector<1x256x128xf32> to vector<256x128xf32>
    %29 = arith.index_cast %c1_i32 : i32 to index
    %c0_9 = arith.constant 0 : index
    %c0_10 = arith.constant 0 : index
    %30 = vector.load %arg2[%29, %c0_9, %c0_10] : memref<2x2x256xf32, #tpu.memory_space<vmem>>, vector<1x2x256xf32>
    %31 = vector.shape_cast %30 : vector<1x2x256xf32> to vector<2x256xf32>
    %cst_11 = arith.constant dense<0.000000e+00> : vector<2x128xf32>
    %32 = tpu.matmul %31, %28, %cst_11 {dimension_numbers = #tpu.dot_dimension_numbers<[1], [0], [0], [1], [0, 0, 1, 1], [], []>} : vector<2x256xf32>, vector<256x128xf32>, vector<2x128xf32> -> vector<2x128xf32>
    %33 = vector.extract_strided_slice %32 {offsets = [0, 0], sizes = [1, 128], strides = [1, 1]} : vector<2x128xf32> to vector<1x128xf32>
    %34 = vector.extract_strided_slice %32 {offsets = [1, 0], sizes = [1, 128], strides = [1, 1]} : vector<2x128xf32> to vector<1x128xf32>
    %35 = arith.index_cast %c1_i32 : i32 to index
    %c0_12 = arith.constant 0 : index
    %c0_13 = arith.constant 0 : index
    %36 = vector.load %arg3[%35, %c0_12, %c0_13] : memref<2x256x2xf32, #tpu.memory_space<vmem>>, vector<1x256x2xf32>
    %37 = vector.shape_cast %36 : vector<1x256x2xf32> to vector<256x2xf32>
    %38 = vector.extract_strided_slice %37 {offsets = [0, 0], sizes = [256, 1], strides = [1, 1]} : vector<256x2xf32> to vector<256x1xf32>
    %39 = vector.extract_strided_slice %37 {offsets = [0, 1], sizes = [256, 1], strides = [1, 1]} : vector<256x2xf32> to vector<256x1xf32>
    %40 = vector.broadcast %38 : vector<256x1xf32> to vector<256x128xf32>
    %41 = vector.broadcast %33 : vector<1x128xf32> to vector<256x128xf32>
    %42 = arith.mulf %40, %41 : vector<256x128xf32>
    %43 = vector.broadcast %39 : vector<256x1xf32> to vector<256x128xf32>
    %44 = vector.broadcast %34 : vector<1x128xf32> to vector<256x128xf32>
    %45 = arith.mulf %43, %44 : vector<256x128xf32>
    %46 = arith.subf %42, %45 : vector<256x128xf32>
    %47 = arith.addf %46, %28 : vector<256x128xf32>
    %48 = arith.index_cast %c1_i32 : i32 to index
    %c0_14 = arith.constant 0 : index
    %c0_15 = arith.constant 0 : index
    %49 = vector.load %arg5[%48, %c0_14, %c0_15] : memref<2x256x128xf32, #tpu.memory_space<vmem>>, vector<1x256x128xf32>
    %50 = vector.shape_cast %49 : vector<1x256x128xf32> to vector<256x128xf32>
    %51 = vector.shape_cast %47 : vector<256x128xf32> to vector<1x256x128xf32>
    tpu.vector_store %arg5[%48, %c0_14, %c0_15], %51 {strides = array<i32>} : memref<2x256x128xf32, #tpu.memory_space<vmem>>, vector<1x256x128xf32>,
    %c2_i32 = arith.constant 2 : i32
    return
  }
  func.func @transform_0(%arg0: i32, %arg1: i32) -> (i32, i32, i32) {
    %c0_i32 = arith.constant 0 : i32
    %c0_i32_0 = arith.constant 0 : i32
    %c0_i32_1 = arith.constant 0 : i32
    return %arg0, %c0_i32, %c0_i32_0 : i32, i32, i32
  }
  func.func @transform_1(%arg0: i32, %arg1: i32) -> (i32, i32, i32) {
    %c0_i32 = arith.constant 0 : i32
    %c0_i32_0 = arith.constant 0 : i32
    %c0_i32_1 = arith.constant 0 : i32
    return %arg0, %c0_i32, %c0_i32_0 : i32, i32, i32
  }
  func.func @transform_2(%arg0: i32, %arg1: i32) -> (i32, i32, i32) {
    %c0_i32 = arith.constant 0 : i32
    %c0_i32_0 = arith.constant 0 : i32
    return %arg0, %c0_i32, %arg1 : i32, i32, i32
  }
  func.func @transform_3(%arg0: i32, %arg1: i32) -> (i32, i32, i32) {
    %c0_i32 = arith.constant 0 : i32
    %c0_i32_0 = arith.constant 0 : i32
    return %arg0, %c0_i32, %arg1 : i32, i32, i32
  }
}

</mosaic_0001>

<llo_original>
// kernel: tpu_custom_call.1
$region0: #{tpu_custom_call.1}
  #allocation0 [shape = 'u32[]', space=smem, size = 0x4, offset = 0x4, fixed_abs, tag = 'smem constant byte address 0x4 - core index']
  #allocation1 [shape = 'u32[144,128]{1,0:T(1,128)}', space=vmem, size = 0x12000, scoped, tag = 'internal scratch']
  %s0 = inlined_call_operand.vmem [shape: f32[2,2,256], index: 0, kind: input, shape index: {}]
  %s1 = inlined_call_operand.vmem [shape: f32[2,256,2], index: 1, kind: input, shape index: {}]
  %s2 = inlined_call_operand.hbm [shape: f32[2,256,256], index: 2, kind: input, shape index: {}]
  %s3 = inlined_call_operand.hbm [shape: f32[2,256,256], index: 3, kind: output, shape index: {}]
  %s4 = sld [smem:[#allocation0]]
  $region49: #{tpu_custom_call.1} parent=0
    _
  %s6 = ssub.s32 1, %s4
  %s7 = scalar_select 0, %s6, %s4
  $region1: #{tpu_custom_call.1} parent=0
    #allocation2 [shape = 'u8[524288]{0}', space=vmem, size = 0x80000, scoped, tag = 'input window, operand 2']
    #allocation3 [shape = 's32[2]{0}', space=sflag, size = 0x8, scoped, tag = 'scoped memory for tpu_custom_call.1']
    #allocation4 [shape = 's32[2]{0}', space=sflag, size = 0x8, scoped, tag = 'scoped memory for tpu_custom_call.1']
    #allocation5 [shape = 'u8[524288]{0}', space=vmem, size = 0x80000, scoped, tag = 'output window, operand 0']
    %8 = vsyncpa [#allocation3], 0
    %s9 = scalar_lea.sflag [#allocation3], 1
    %10 = vsyncpa %s9, 0
    %11 = vsyncpa [#allocation4], 0
    %s12 = scalar_lea.sflag [#allocation4], 1
    %13 = vsyncpa %s12, 0
    loop: start=0, step=1, limit=4
    $region2: #{tpu_custom_call.1} parent=1 // loop_pre_header
      _
    $region3: #{tpu_custom_call.1} parent=1 // loop_header
      %s15 = sphi 0, %s19
      %p16 = scmp.ge.s32.totalorder %s15, 4
      %s22 = sphi 0, %s34
      %s23 = sphi 0, %s30
      %s24 = sphi 0, %s22
      %s25 = sphi 0, %s23
      %s26 = sphi 0, %s24
      %s27 = sphi 0, %s25
      %s37 = sphi 0, %s39
      %s40 = sphi 0, %s37
      %s41 = sphi 0, %s40
      %s57 = sphi 0, %s41
      %s63 = sphi 0, %s65
      %s66 = sphi 0, %s63
      %s67 = sphi 0, %s66
      %s83 = sphi 0, %s67
      %s91 = sphi 0, %s93
      %s94 = sphi 0, %s91
      %s95 = sphi 0, %s94
      %s111 = sphi 0, %s95
      %s119 = sphi 0, %s121
      %s122 = sphi 0, %s119
      %s123 = sphi 0, %s122
      %s139 = sphi 0, %s123
    $region4: #{tpu_custom_call.1} parent=1 // loop_header_branch
      %18 = sbr.rel (%p16) target = $region8
    $region5: #{tpu_custom_call.1} parent=1 // loop_body
      %s20 = ssub.s32 %s15, 1
      %s21 = ssub.s32 %s15, 2
      %s28 = sadd.s32 1, %s23
      %p29 = scmp.ge.s32.totalorder %s28, 2
      %s30 = scalar_select %p29, 0, %s28
      %s31 = sadd.s32 1, %s22
      %s32 = scalar_select %p29, %s31, %s22
      %p33 = scmp.ge.s32.totalorder %s32, 1
      %s34 = scalar_select %p33, 0, %s32
      %s35 = ssub.s32 %s22, %s34
      %p36 = scmp.eq.s32.totalorder %s35, 0
      %s38 = sadd.s32 %s37, 1
      %s39 = scalar_select %p36, %s37, %s38
      %p42 = pneg %p36
      %p43 = scmp.eq.s32.totalorder %s15, 1
      %p44 = por %p42, %p43
      %p45 = scmp.ne.s32.totalorder %s37, %s40
      %p46 = scmp.eq.s32.totalorder %s15, 0
      %p47 = por %p45, %p46
      %p48 = scmp.ne.s32.totalorder %s37, %s40
      %p49 = scmp.eq.s32.totalorder %s20, 1
      %p50 = por %p48, %p49
      %p51 = scmp.ne.s32.totalorder %s40, %s41
      %p52 = scmp.eq.s32.totalorder %s20, 0
      %p53 = por %p51, %p52
      %p54 = scmp.ne.s32.totalorder %s40, %s41
      %p55 = scmp.eq.s32.totalorder %s21, 1
      %p56 = por %p54, %p55
      %p58 = scmp.ne.s32.totalorder %s41, %s57
      %p59 = scmp.eq.s32.totalorder %s21, 0
      %p60 = por %p58, %p59
      %s61 = ssub.s32 %s22, %s34
      %p62 = scmp.eq.s32.totalorder %s61, 0
      %s64 = sadd.s32 %s63, 1
      %s65 = scalar_select %p62, %s63, %s64
      %p68 = pneg %p62
      %p69 = scmp.eq.s32.totalorder %s15, 1
      %p70 = por %p68, %p69
      %p71 = scmp.ne.s32.totalorder %s63, %s66
      %p72 = scmp.eq.s32.totalorder %s15, 0
      %p73 = por %p71, %p72
      %p74 = scmp.ne.s32.totalorder %s63, %s66
      %p75 = scmp.eq.s32.totalorder %s20, 1
      %p76 = por %p74, %p75
      %p77 = scmp.ne.s32.totalorder %s66, %s67
      %p78 = scmp.eq.s32.totalorder %s20, 0
      %p79 = por %p77, %p78
      %p80 = scmp.ne.s32.totalorder %s66, %s67
      %p81 = scmp.eq.s32.totalorder %s21, 1
      %p82 = por %p80, %p81
      %p84 = scmp.ne.s32.totalorder %s67, %s83
      %p85 = scmp.eq.s32.totalorder %s21, 0
      %p86 = por %p84, %p85
      %s87 = ssub.s32 %s22, %s34
      %s88 = ssub.s32 %s23, %s30
      %s89 = sor.u32 %s87, %s88
      %p90 = scmp.eq.s32.totalorder %s89, 0
      %s92 = sadd.s32 %s91, 1
      %s93 = scalar_select %p90, %s91, %s92
      %p96 = pneg %p90
      %p97 = scmp.eq.s32.totalorder %s15, 1
      %p98 = por %p96, %p97
      %p99 = scmp.ne.s32.totalorder %s91, %s94
      %p100 = scmp.eq.s32.totalorder %s15, 0
      %p101 = por %p99, %p100
      %p102 = scmp.ne.s32.totalorder %s91, %s94
      %p103 = scmp.eq.s32.totalorder %s20, 1
      %p104 = por %p102, %p103
      %p105 = scmp.ne.s32.totalorder %s94, %s95
      %p106 = scmp.eq.s32.totalorder %s20, 0
      %p107 = por %p105, %p106
      %p108 = scmp.ne.s32.totalorder %s94, %s95
      %p109 = scmp.eq.s32.totalorder %s21, 1
      %p110 = por %p108, %p109
      %p112 = scmp.ne.s32.totalorder %s95, %s111
      %p113 = scmp.eq.s32.totalorder %s21, 0
      %p114 = por %p112, %p113
      %s115 = ssub.s32 %s22, %s34
      %s116 = ssub.s32 %s23, %s30
      %s117 = sor.u32 %s115, %s116
      %p118 = scmp.eq.s32.totalorder %s117, 0
      %s120 = sadd.s32 %s119, 1
      %s121 = scalar_select %p118, %s119, %s120
      %p124 = pneg %p118
      %p125 = scmp.eq.s32.totalorder %s15, 1
      %p126 = por %p124, %p125
      %p127 = scmp.ne.s32.totalorder %s119, %s122
      %p128 = scmp.eq.s32.totalorder %s15, 0
      %p129 = por %p127, %p128
      %p130 = scmp.ne.s32.totalorder %s119, %s122
      %p131 = scmp.eq.s32.totalorder %s20, 1
      %p132 = por %p130, %p131
      %p133 = scmp.ne.s32.totalorder %s122, %s123
      %p134 = scmp.eq.s32.totalorder %s20, 0
      %p135 = por %p133, %p134
      %p136 = scmp.ne.s32.totalorder %s122, %s123
      %p137 = scmp.eq.s32.totalorder %s21, 1
      %p138 = por %p136, %p137
      %p140 = scmp.ne.s32.totalorder %s123, %s139
      %p141 = scmp.eq.s32.totalorder %s21, 0
      %p142 = por %p140, %p141
      %p143 = scmp.le.s32.totalorder 1, %s15
      %p144 = scmp.lt.s32.totalorder %s15, 3
      %p145 = pnand %p143, %p144
      %p146 = pneg %p145
      // Predicated region
      $region9: #{tpu_custom_call.1} parent=5 // pred_check
        _
      $region10: #{tpu_custom_call.1} parent=5 // pred_check_branch
        %148 = sbr.rel (%p145) target = $region12
      $region11: #{tpu_custom_call.1} parent=5 // pred_region
        %s149 = ssub.s32 %s15, 1
        // Predicated region
        $region13: #{tpu_custom_call.1} parent=11 // pred_check
          %p150 = pneg %p53
        $region14: #{tpu_custom_call.1} parent=11 // pred_check_branch
          %152 = sbr.rel (%p150) target = $region16
        $region15: #{tpu_custom_call.1} parent=11 // pred_region
          %s153 = smul.u32 2, %s24
          %p154 = scmp.lt.s32.totalorder %s153, 1
          %s155 = scalar_select %p154, %s153, 1
          %s156 = smul.addr %s155, 2
          %s157 = smul.addr %s156, 2
          %s158 = scalar_lea.vmem %s0, %s157
          %s159 = smul.u32 2, %s24
        $region16: #{tpu_custom_call.1} parent=11 // pred_fallthru
          _
        // Predicated region
        $region17: #{tpu_custom_call.1} parent=11 // pred_check
          %p160 = pneg %p79
        $region18: #{tpu_custom_call.1} parent=11 // pred_check_branch
          %162 = sbr.rel (%p160) target = $region20
        $region19: #{tpu_custom_call.1} parent=11 // pred_region
          %s163 = smul.u32 2, %s24
          %p164 = scmp.lt.s32.totalorder %s163, 1
          %s165 = scalar_select %p164, %s163, 1
          %s166 = smul.addr %s165, 32
          %s167 = smul.addr %s166, 8
          %s168 = scalar_lea.vmem %s1, %s167
          %s169 = smul.u32 2, %s24
        $region20: #{tpu_custom_call.1} parent=11 // pred_fallthru
          _
      $region12: #{tpu_custom_call.1} parent=5 // pred_fallthru
        _
      %p170 = scmp.lt.s32.totalorder %s15, 2
      // Predicated region
      $region21: #{tpu_custom_call.1} parent=5 // pred_check
        %p171 = pneg %p170
      $region22: #{tpu_custom_call.1} parent=5 // pred_check_branch
        %173 = sbr.rel (%p171) target = $region24
      $region23: #{tpu_custom_call.1} parent=5 // pred_region
        // Predicated region
        $region25: #{tpu_custom_call.1} parent=23 // pred_check
          %p174 = pneg %p101
        $region26: #{tpu_custom_call.1} parent=23 // pred_check_branch
          %176 = sbr.rel (%p174) target = $region28
        $region27: #{tpu_custom_call.1} parent=23 // pred_region
          %s177 = sand.u32 %s91, 1
          %s178 = scalar_lea.sflag [#allocation3], %s177
          %s179 = sand.u32 %s91, 1
          %s180 = smul.addr %s179, 512
          %s181 = scalar_lea.vmem [#allocation2], %s180
          %s182 = smul.u32 2, %s22
          %s184 = ssub.s32 8192, 8192
          %185 = vsyncadd %s178, %s184
          %s186 = smul.addr %s182, 64
          %s187 = sadd.s32 %s23, %s186
          %s188 = smul.addr %s187, 128
          %s189 = scalar_lea.hbm %s2, %s188
          %s190 = sshll.u32 %s181, 4
          %s191 = int_to_ptr.vmem [resolvable:$true] %s190
          %196 = dma.hbm_to_vmem [thread:$0]  %s189, 8192, %s191, %s178, 256, 128, 8
        $region28: #{tpu_custom_call.1} parent=23 // pred_fallthru
          _
      $region24: #{tpu_custom_call.1} parent=5 // pred_fallthru
        _
      %p197 = scmp.le.s32.totalorder 1, %s15
      %p198 = scmp.lt.s32.totalorder %s15, 3
      %p199 = pnand %p197, %p198
      %p200 = pneg %p199
      // Predicated region
      $region29: #{tpu_custom_call.1} parent=5 // pred_check
        _
      $region30: #{tpu_custom_call.1} parent=5 // pred_check_branch
        %202 = sbr.rel (%p199) target = $region32
      $region31: #{tpu_custom_call.1} parent=5 // pred_region
        %s203 = ssub.s32 %s15, 1
        %s204 = sand.u32 %s94, 1
        %s205 = scalar_lea.sflag [#allocation3], %s204
        %s206 = sand.u32 %s94, 1
        %s207 = smul.addr %s206, 512
        %s208 = scalar_lea.vmem [#allocation2], %s207
        // Predicated region
        $region33: #{tpu_custom_call.1} parent=31 // pred_check
          %p209 = pneg %p107
        $region34: #{tpu_custom_call.1} parent=31 // pred_check_branch
          %211 = sbr.rel (%p209) target = $region36
        $region35: #{tpu_custom_call.1} parent=31 // pred_region
          %212 = dma.done %s205, 8192
        $region36: #{tpu_custom_call.1} parent=31 // pred_fallthru
          _
        %s213 = smul.u32 2, %s24
        %p214 = scmp.lt.s32.totalorder %s213, 1
        %s215 = scalar_select %p214, %s213, 1
        %s216 = smul.addr %s215, 2
        %s217 = smul.addr %s216, 2
        %s218 = scalar_lea.vmem %s0, %s217
        %p219 = pneg %p53
        %p220 = pneg %p50
        %s221 = smul.u32 2, %s24
        %p222 = scmp.lt.s32.totalorder %s221, 1
        %s223 = scalar_select %p222, %s221, 1
        %s224 = smul.addr %s223, 32
        %s225 = smul.addr %s224, 8
        %s226 = scalar_lea.vmem %s1, %s225
        %p227 = pneg %p79
        %p228 = pneg %p76
        %s229 = sand.u32 %s94, 1
        %s230 = scalar_lea.sflag [#allocation3], %s229
        %s231 = sand.u32 %s94, 1
        %s232 = smul.addr %s231, 512
        %s233 = scalar_lea.vmem [#allocation2], %s232
        %p234 = pneg %p107
        %p235 = pneg %p104
        %p236 = pneg %p135
        %p237 = pneg %p132
        %s238 = sand.u32 %s122, 1
        %s239 = scalar_lea.sflag [#allocation4], %s238
        %s240 = sand.u32 %s122, 1
        %s241 = smul.addr %s240, 512
        %s242 = scalar_lea.vmem [#allocation5], %s241
        %s243 = smul.u32 2, %s24
        %p244 = scmp.lt.s32.totalorder %s243, 1
        %s245 = scalar_select %p244, %s243, 1
        %s246 = smul.addr %s245, 2
        %s247 = smul.addr %s246, 2
        %s248 = scalar_lea.vmem %s0, %s247
        %s249 = smul.u32 2, %s24
        %s250 = smul.u32 2, %s24
        %p251 = scmp.lt.s32.totalorder %s250, 1
        %s252 = scalar_select %p251, %s250, 1
        %s253 = smul.addr %s252, 32
        %s254 = smul.addr %s253, 8
        %s255 = scalar_lea.vmem %s1, %s254
        %s256 = smul.u32 2, %s24
        %s257 = smul.u32 2, %s24
        %s258 = smul.u32 2, %s24
        %v259 = vld [vmem:[%s208] sm:$0xff]
        %v260 = vld [vmem:[%s208 + $0x8] sm:$0xff]
        %v261 = vld [vmem:[%s208 + $0x10] sm:$0xff]
        %v262 = vld [vmem:[%s208 + $0x18] sm:$0xff]
        %v263 = vld [vmem:[%s208 + $0x20] sm:$0xff]
        %v264 = vld [vmem:[%s208 + $0x28] sm:$0xff]
        %v265 = vld [vmem:[%s208 + $0x30] sm:$0xff]
        %v266 = vld [vmem:[%s208 + $0x38] sm:$0xff]
        %v267 = vld [vmem:[%s208 + $0x40] sm:$0xff]
        %v268 = vld [vmem:[%s208 + $0x48] sm:$0xff]
        %v269 = vld [vmem:[%s208 + $0x50] sm:$0xff]
        %v270 = vld [vmem:[%s208 + $0x58] sm:$0xff]
        %v271 = vld [vmem:[%s208 + $0x60] sm:$0xff]
        %v272 = vld [vmem:[%s208 + $0x68] sm:$0xff]
        %v273 = vld [vmem:[%s208 + $0x70] sm:$0xff]
        %v274 = vld [vmem:[%s208 + $0x78] sm:$0xff]
        %v275 = vld [vmem:[%s208 + $0x80] sm:$0xff]
        %v276 = vld [vmem:[%s208 + $0x88] sm:$0xff]
        %v277 = vld [vmem:[%s208 + $0x90] sm:$0xff]
        %v278 = vld [vmem:[%s208 + $0x98] sm:$0xff]
        %v279 = vld [vmem:[%s208 + $0xa0] sm:$0xff]
        %v280 = vld [vmem:[%s208 + $0xa8] sm:$0xff]
        %v281 = vld [vmem:[%s208 + $0xb0] sm:$0xff]
        %v282 = vld [vmem:[%s208 + $0xb8] sm:$0xff]
        %v283 = vld [vmem:[%s208 + $0xc0] sm:$0xff]
        %v284 = vld [vmem:[%s208 + $0xc8] sm:$0xff]
        %v285 = vld [vmem:[%s208 + $0xd0] sm:$0xff]
        %v286 = vld [vmem:[%s208 + $0xd8] sm:$0xff]
        %v287 = vld [vmem:[%s208 + $0xe0] sm:$0xff]
        %v288 = vld [vmem:[%s208 + $0xe8] sm:$0xff]
        %v289 = vld [vmem:[%s208 + $0xf0] sm:$0xff]
        %v290 = vld [vmem:[%s208 + $0xf8] sm:$0xff]
        %v291 = vld [vmem:[%s248] sm:$0xf]
        %v294 = vunpack.c.l.s4 1983009808
        %v295 = vunpack.c.0.s8 %v294
        %v296 = vlaneseq
        %v297 = vshrl.u32 %v296, 7
        %v298 = vsub.s32 %v295, %v297
        %v299 = vrot.slane %v291, %v298
        %v300 = vcombine.high %v299, %v299
        %303 = vmatprep.subr.mxu0 0.0
        %304 = vmatpush1.msra.mxu0 %v259
        %305 = vmatprep.subr.mxu0 0.0
        %306 = vmatpush1.msra.mxu0 %v260
        %307 = vmatprep.subr.mxu0 0.0
        %308 = vmatpush1.msra.mxu0 %v261
        %309 = vmatprep.subr.mxu0 0.0
        %310 = vmatpush1.msra.mxu0 %v262
        %311 = vmatprep.subr.mxu0 0.0
        %312 = vmatpush1.msra.mxu0 %v263
        %313 = vmatprep.subr.mxu0 0.0
        %314 = vmatpush1.msra.mxu0 %v264
        %315 = vmatprep.subr.mxu0 0.0
        %316 = vmatpush1.msra.mxu0 %v265
        %317 = vmatprep.subr.mxu0 0.0
        %318 = vmatpush1.msra.mxu0 %v266
        %319 = vmatprep.subr.mxu0 0.0
        %320 = vmatpush1.msra.mxu0 %v267
        %321 = vmatprep.subr.mxu0 0.0
        %322 = vmatpush1.msra.mxu0 %v268
        %323 = vmatprep.subr.mxu0 0.0
        %324 = vmatpush1.msra.mxu0 %v269
        %325 = vmatprep.subr.mxu0 0.0
        %326 = vmatpush1.msra.mxu0 %v270
        %327 = vmatprep.subr.mxu0 0.0
        %328 = vmatpush1.msra.mxu0 %v271
        %329 = vmatprep.subr.mxu0 0.0
        %330 = vmatpush1.msra.mxu0 %v272
        %331 = vmatprep.subr.mxu0 0.0
        %332 = vmatpush1.msra.mxu0 %v273
        %333 = vmatprep.subr.mxu0 0.0
        %334 = vmatpush1.msra.mxu0 %v274
        %335 = vmatprep.subr.mxu0 0.0
        %336 = vmatpush1.msra.mxu0 %v275
        %337 = vmatprep.subr.mxu0 0.0
        %338 = vmatpush1.msra.mxu0 %v276
        %339 = vmatprep.subr.mxu0 0.0
        %340 = vmatpush1.msra.mxu0 %v277
        %341 = vmatprep.subr.mxu0 0.0
        %342 = vmatpush1.msra.mxu0 %v278
        %343 = vmatprep.subr.mxu0 0.0
        %344 = vmatpush1.msra.mxu0 %v279
        %345 = vmatprep.subr.mxu0 0.0
        %346 = vmatpush1.msra.mxu0 %v280
        %347 = vmatprep.subr.mxu0 0.0
        %348 = vmatpush1.msra.mxu0 %v281
        %349 = vmatprep.subr.mxu0 0.0
        %350 = vmatpush1.msra.mxu0 %v282
        %351 = vmatprep.subr.mxu0 0.0
        %352 = vmatpush1.msra.mxu0 %v283
        %353 = vmatprep.subr.mxu0 0.0
        %354 = vmatpush1.msra.mxu0 %v284
        %355 = vmatprep.subr.mxu0 0.0
        %356 = vmatpush1.msra.mxu0 %v285
        %357 = vmatprep.subr.mxu0 0.0
        %358 = vmatpush1.msra.mxu0 %v286
        %359 = vmatprep.subr.mxu0 0.0
        %360 = vmatpush1.msra.mxu0 %v287
        %361 = vmatprep.subr.mxu0 0.0
        %362 = vmatpush1.msra.mxu0 %v288
        %363 = vmatprep.subr.mxu0 0.0
        %364 = vmatpush1.msra.mxu0 %v289
        %365 = vmatprep.subr.mxu0 0.0
        %366 = vmatpush1.msra.mxu0 %v290
        %367 = vmatprep.mubr.f32.mxu0 %v300
        %368 = vmatmul.mubr.f32.gmra.mrb[0].mxu0 %v299
        %v369 = vpop.f32.mrb[0].mxu0
        %v370 = vadd.f32 0.0, %v369
        %v371 = vpop.f32.mrb[0].mxu0
        %372 = vdwg.mxu0
        %v373 = vld [vmem:[%s255] sm:$0xff]
        %v374 = vld [vmem:[%s255 + $0x8] sm:$0xff]
        %v375 = vld [vmem:[%s255 + $0x10] sm:$0xff]
        %v376 = vld [vmem:[%s255 + $0x18] sm:$0xff]
        %v377 = vld [vmem:[%s255 + $0x20] sm:$0xff]
        %v378 = vld [vmem:[%s255 + $0x28] sm:$0xff]
        %v379 = vld [vmem:[%s255 + $0x30] sm:$0xff]
        %v380 = vld [vmem:[%s255 + $0x38] sm:$0xff]
        %v381 = vld [vmem:[%s255 + $0x40] sm:$0xff]
        %v382 = vld [vmem:[%s255 + $0x48] sm:$0xff]
        %v383 = vld [vmem:[%s255 + $0x50] sm:$0xff]
        %v384 = vld [vmem:[%s255 + $0x58] sm:$0xff]
        %v385 = vld [vmem:[%s255 + $0x60] sm:$0xff]
        %v386 = vld [vmem:[%s255 + $0x68] sm:$0xff]
        %v387 = vld [vmem:[%s255 + $0x70] sm:$0xff]
        %v388 = vld [vmem:[%s255 + $0x78] sm:$0xff]
        %v389 = vld [vmem:[%s255 + $0x80] sm:$0xff]
        %v390 = vld [vmem:[%s255 + $0x88] sm:$0xff]
        %v391 = vld [vmem:[%s255 + $0x90] sm:$0xff]
        %v392 = vld [vmem:[%s255 + $0x98] sm:$0xff]
        %v393 = vld [vmem:[%s255 + $0xa0] sm:$0xff]
        %v394 = vld [vmem:[%s255 + $0xa8] sm:$0xff]
        %v395 = vld [vmem:[%s255 + $0xb0] sm:$0xff]
        %v396 = vld [vmem:[%s255 + $0xb8] sm:$0xff]
        %v397 = vld [vmem:[%s255 + $0xc0] sm:$0xff]
        %v398 = vld [vmem:[%s255 + $0xc8] sm:$0xff]
        %v399 = vld [vmem:[%s255 + $0xd0] sm:$0xff]
        %v400 = vld [vmem:[%s255 + $0xd8] sm:$0xff]
        %v401 = vld [vmem:[%s255 + $0xe0] sm:$0xff]
        %v402 = vld [vmem:[%s255 + $0xe8] sm:$0xff]
        %v403 = vld [vmem:[%s255 + $0xf0] sm:$0xff]
        %v404 = vld [vmem:[%s255 + $0xf8] sm:$0xff]
        %406 = vset.pattern.permute.xlu0 0
        %407 = vperm.xlu0 %406, %v373
        %v408 = vpop.permute.xlu0 %407
        %411 = vset.pattern.permute.xlu0 0
        %412 = vperm.xlu0 %411, %v374
        %v413 = vpop.permute.xlu0 %412
        %416 = vset.pattern.permute.xlu0 0
        %417 = vperm.xlu0 %416, %v375
        %v418 = vpop.permute.xlu0 %417
        %421 = vset.pattern.permute.xlu0 0
        %422 = vperm.xlu0 %421, %v376
        %v423 = vpop.permute.xlu0 %422
        %426 = vset.pattern.permute.xlu0 0
        %427 = vperm.xlu0 %426, %v377
        %v428 = vpop.permute.xlu0 %427
        %431 = vset.pattern.permute.xlu0 0
        %432 = vperm.xlu0 %431, %v378
        %v433 = vpop.permute.xlu0 %432
        %436 = vset.pattern.permute.xlu0 0
        %437 = vperm.xlu0 %436, %v379
        %v438 = vpop.permute.xlu0 %437
        %441 = vset.pattern.permute.xlu0 0
        %442 = vperm.xlu0 %441, %v380
        %v443 = vpop.permute.xlu0 %442
        %446 = vset.pattern.permute.xlu0 0
        %447 = vperm.xlu0 %446, %v381
        %v448 = vpop.permute.xlu0 %447
        %451 = vset.pattern.permute.xlu0 0
        %452 = vperm.xlu0 %451, %v382
        %v453 = vpop.permute.xlu0 %452
        %456 = vset.pattern.permute.xlu0 0
        %457 = vperm.xlu0 %456, %v383
        %v458 = vpop.permute.xlu0 %457
        %461 = vset.pattern.permute.xlu0 0
        %462 = vperm.xlu0 %461, %v384
        %v463 = vpop.permute.xlu0 %462
        %466 = vset.pattern.permute.xlu0 0
        %467 = vperm.xlu0 %466, %v385
        %v468 = vpop.permute.xlu0 %467
        %471 = vset.pattern.permute.xlu0 0
        %472 = vperm.xlu0 %471, %v386
        %v473 = vpop.permute.xlu0 %472
        %476 = vset.pattern.permute.xlu0 0
        %477 = vperm.xlu0 %476, %v387
        %v478 = vpop.permute.xlu0 %477
        %481 = vset.pattern.permute.xlu0 0
        %482 = vperm.xlu0 %481, %v388
        %v483 = vpop.permute.xlu0 %482
        %486 = vset.pattern.permute.xlu0 0
        %487 = vperm.xlu0 %486, %v389
        %v488 = vpop.permute.xlu0 %487
        %491 = vset.pattern.permute.xlu0 0
        %492 = vperm.xlu0 %491, %v390
        %v493 = vpop.permute.xlu0 %492
        %496 = vset.pattern.permute.xlu0 0
        %497 = vperm.xlu0 %496, %v391
        %v498 = vpop.permute.xlu0 %497
        %501 = vset.pattern.permute.xlu0 0
        %502 = vperm.xlu0 %501, %v392
        %v503 = vpop.permute.xlu0 %502
        %506 = vset.pattern.permute.xlu0 0
        %507 = vperm.xlu0 %506, %v393
        %v508 = vpop.permute.xlu0 %507
        %511 = vset.pattern.permute.xlu0 0
        %512 = vperm.xlu0 %511, %v394
        %v513 = vpop.permute.xlu0 %512
        %516 = vset.pattern.permute.xlu0 0
        %517 = vperm.xlu0 %516, %v395
        %v518 = vpop.permute.xlu0 %517
        %521 = vset.pattern.permute.xlu0 0
        %522 = vperm.xlu0 %521, %v396
        %v523 = vpop.permute.xlu0 %522
        %526 = vset.pattern.permute.xlu0 0
        %527 = vperm.xlu0 %526, %v397
        %v528 = vpop.permute.xlu0 %527
        %531 = vset.pattern.permute.xlu0 0
        %532 = vperm.xlu0 %531, %v398
        %v533 = vpop.permute.xlu0 %532
        %536 = vset.pattern.permute.xlu0 0
        %537 = vperm.xlu0 %536, %v399
        %v538 = vpop.permute.xlu0 %537
        %541 = vset.pattern.permute.xlu0 0
        %542 = vperm.xlu0 %541, %v400
        %v543 = vpop.permute.xlu0 %542
        %546 = vset.pattern.permute.xlu0 0
        %547 = vperm.xlu0 %546, %v401
        %v548 = vpop.permute.xlu0 %547
        %551 = vset.pattern.permute.xlu0 0
        %552 = vperm.xlu0 %551, %v402
        %v553 = vpop.permute.xlu0 %552
        %556 = vset.pattern.permute.xlu0 0
        %557 = vperm.xlu0 %556, %v403
        %v558 = vpop.permute.xlu0 %557
        %561 = vset.pattern.permute.xlu0 0
        %562 = vperm.xlu0 %561, %v404
        %v563 = vpop.permute.xlu0 %562
        %v565 = vlaneseq
        %v566 = vshrl.u32 %v565, 7
        %v567 = vsub.s32 0, %v566
        %v568 = vrot.slane %v370, %v567
        %v569 = vmul.f32 %v408, %v568
        %v570 = vmul.f32 %v413, %v568
        %v571 = vmul.f32 %v418, %v568
        %v572 = vmul.f32 %v423, %v568
        %v573 = vmul.f32 %v428, %v568
        %v574 = vmul.f32 %v433, %v568
        %v575 = vmul.f32 %v438, %v568
        %v576 = vmul.f32 %v443, %v568
        %v577 = vmul.f32 %v448, %v568
        %v578 = vmul.f32 %v453, %v568
        %v579 = vmul.f32 %v458, %v568
        %v580 = vmul.f32 %v463, %v568
        %v581 = vmul.f32 %v468, %v568
        %v582 = vmul.f32 %v473, %v568
        %v583 = vmul.f32 %v478, %v568
        %v584 = vmul.f32 %v483, %v568
        %v585 = vmul.f32 %v488, %v568
        %v586 = vmul.f32 %v493, %v568
        %v587 = vmul.f32 %v498, %v568
        %v588 = vmul.f32 %v503, %v568
        %v589 = vmul.f32 %v508, %v568
        %v590 = vmul.f32 %v513, %v568
        %v591 = vmul.f32 %v518, %v568
        %v592 = vmul.f32 %v523, %v568
        %v593 = vmul.f32 %v528, %v568
        %v594 = vmul.f32 %v533, %v568
        %v595 = vmul.f32 %v538, %v568
        %v596 = vmul.f32 %v543, %v568
        %v597 = vmul.f32 %v548, %v568
        %v598 = vmul.f32 %v553, %v568
        %v599 = vmul.f32 %v558, %v568
        %v600 = vmul.f32 %v563, %v568
        %601 = vset.pattern.permute.xlu0 1
        %602 = vperm.xlu0 %601, %v373
        %v603 = vpop.permute.xlu0 %602
        %605 = vset.pattern.permute.xlu0 1
        %606 = vperm.xlu0 %605, %v374
        %v607 = vpop.permute.xlu0 %606
        %609 = vset.pattern.permute.xlu0 1
        %610 = vperm.xlu0 %609, %v375
        %v611 = vpop.permute.xlu0 %610
        %613 = vset.pattern.permute.xlu0 1
        %614 = vperm.xlu0 %613, %v376
        %v615 = vpop.permute.xlu0 %614
        %617 = vset.pattern.permute.xlu0 1
        %618 = vperm.xlu0 %617, %v377
        %v619 = vpop.permute.xlu0 %618
        %621 = vset.pattern.permute.xlu0 1
        %622 = vperm.xlu0 %621, %v378
        %v623 = vpop.permute.xlu0 %622
        %625 = vset.pattern.permute.xlu0 1
        %626 = vperm.xlu0 %625, %v379
        %v627 = vpop.permute.xlu0 %626
        %629 = vset.pattern.permute.xlu0 1
        %630 = vperm.xlu0 %629, %v380
        %v631 = vpop.permute.xlu0 %630
        %633 = vset.pattern.permute.xlu0 1
        %634 = vperm.xlu0 %633, %v381
        %v635 = vpop.permute.xlu0 %634
        %637 = vset.pattern.permute.xlu0 1
        %638 = vperm.xlu0 %637, %v382
        %v639 = vpop.permute.xlu0 %638
        %641 = vset.pattern.permute.xlu0 1
        %642 = vperm.xlu0 %641, %v383
        %v643 = vpop.permute.xlu0 %642
        %645 = vset.pattern.permute.xlu0 1
        %646 = vperm.xlu0 %645, %v384
        %v647 = vpop.permute.xlu0 %646
        %649 = vset.pattern.permute.xlu0 1
        %650 = vperm.xlu0 %649, %v385
        %v651 = vpop.permute.xlu0 %650
        %653 = vset.pattern.permute.xlu0 1
        %654 = vperm.xlu0 %653, %v386
        %v655 = vpop.permute.xlu0 %654
        %657 = vset.pattern.permute.xlu0 1
        %658 = vperm.xlu0 %657, %v387
        %v659 = vpop.permute.xlu0 %658
        %661 = vset.pattern.permute.xlu0 1
        %662 = vperm.xlu0 %661, %v388
        %v663 = vpop.permute.xlu0 %662
        %665 = vset.pattern.permute.xlu0 1
        %666 = vperm.xlu0 %665, %v389
        %v667 = vpop.permute.xlu0 %666
        %669 = vset.pattern.permute.xlu0 1
        %670 = vperm.xlu0 %669, %v390
        %v671 = vpop.permute.xlu0 %670
        %673 = vset.pattern.permute.xlu0 1
        %674 = vperm.xlu0 %673, %v391
        %v675 = vpop.permute.xlu0 %674
        %677 = vset.pattern.permute.xlu0 1
        %678 = vperm.xlu0 %677, %v392
        %v679 = vpop.permute.xlu0 %678
        %681 = vset.pattern.permute.xlu0 1
        %682 = vperm.xlu0 %681, %v393
        %v683 = vpop.permute.xlu0 %682
        %685 = vset.pattern.permute.xlu0 1
        %686 = vperm.xlu0 %685, %v394
        %v687 = vpop.permute.xlu0 %686
        %689 = vset.pattern.permute.xlu0 1
        %690 = vperm.xlu0 %689, %v395
        %v691 = vpop.permute.xlu0 %690
        %693 = vset.pattern.permute.xlu0 1
        %694 = vperm.xlu0 %693, %v396
        %v695 = vpop.permute.xlu0 %694
        %697 = vset.pattern.permute.xlu0 1
        %698 = vperm.xlu0 %697, %v397
        %v699 = vpop.permute.xlu0 %698
        %701 = vset.pattern.permute.xlu0 1
        %702 = vperm.xlu0 %701, %v398
        %v703 = vpop.permute.xlu0 %702
        %705 = vset.pattern.permute.xlu0 1
        %706 = vperm.xlu0 %705, %v399
        %v707 = vpop.permute.xlu0 %706
        %709 = vset.pattern.permute.xlu0 1
        %710 = vperm.xlu0 %709, %v400
        %v711 = vpop.permute.xlu0 %710
        %713 = vset.pattern.permute.xlu0 1
        %714 = vperm.xlu0 %713, %v401
        %v715 = vpop.permute.xlu0 %714
        %717 = vset.pattern.permute.xlu0 1
        %718 = vperm.xlu0 %717, %v402
        %v719 = vpop.permute.xlu0 %718
        %721 = vset.pattern.permute.xlu0 1
        %722 = vperm.xlu0 %721, %v403
        %v723 = vpop.permute.xlu0 %722
        %725 = vset.pattern.permute.xlu0 1
        %726 = vperm.xlu0 %725, %v404
        %v727 = vpop.permute.xlu0 %726
        %v729 = vlaneseq
        %v730 = vshrl.u32 %v729, 7
        %v731 = vsub.s32 1, %v730
        %v732 = vrot.slane %v370, %v731
        %v733 = vmul.f32 %v603, %v732
        %v734 = vmul.f32 %v607, %v732
        %v735 = vmul.f32 %v611, %v732
        %v736 = vmul.f32 %v615, %v732
        %v737 = vmul.f32 %v619, %v732
        %v738 = vmul.f32 %v623, %v732
        %v739 = vmul.f32 %v627, %v732
        %v740 = vmul.f32 %v631, %v732
        %v741 = vmul.f32 %v635, %v732
        %v742 = vmul.f32 %v639, %v732
        %v743 = vmul.f32 %v643, %v732
        %v744 = vmul.f32 %v647, %v732
        %v745 = vmul.f32 %v651, %v732
        %v746 = vmul.f32 %v655, %v732
        %v747 = vmul.f32 %v659, %v732
        %v748 = vmul.f32 %v663, %v732
        %v749 = vmul.f32 %v667, %v732
        %v750 = vmul.f32 %v671, %v732
        %v751 = vmul.f32 %v675, %v732
        %v752 = vmul.f32 %v679, %v732
        %v753 = vmul.f32 %v683, %v732
        %v754 = vmul.f32 %v687, %v732
        %v755 = vmul.f32 %v691, %v732
        %v756 = vmul.f32 %v695, %v732
        %v757 = vmul.f32 %v699, %v732
        %v758 = vmul.f32 %v703, %v732
        %v759 = vmul.f32 %v707, %v732
        %v760 = vmul.f32 %v711, %v732
        %v761 = vmul.f32 %v715, %v732
        %v762 = vmul.f32 %v719, %v732
        %v763 = vmul.f32 %v723, %v732
        %v764 = vmul.f32 %v727, %v732
        %v765 = vsub.f32 %v569, %v733
        %v766 = vsub.f32 %v570, %v734
        %v767 = vsub.f32 %v571, %v735
        %v768 = vsub.f32 %v572, %v736
        %v769 = vsub.f32 %v573, %v737
        %v770 = vsub.f32 %v574, %v738
        %v771 = vsub.f32 %v575, %v739
        %v772 = vsub.f32 %v576, %v740
        %v773 = vsub.f32 %v577, %v741
        %v774 = vsub.f32 %v578, %v742
        %v775 = vsub.f32 %v579, %v743
        %v776 = vsub.f32 %v580, %v744
        %v777 = vsub.f32 %v581, %v745
        %v778 = vsub.f32 %v582, %v746
        %v779 = vsub.f32 %v583, %v747
        %v780 = vsub.f32 %v584, %v748
        %v781 = vsub.f32 %v585, %v749
        %v782 = vsub.f32 %v586, %v750
        %v783 = vsub.f32 %v587, %v751
        %v784 = vsub.f32 %v588, %v752
        %v785 = vsub.f32 %v589, %v753
        %v786 = vsub.f32 %v590, %v754
        %v787 = vsub.f32 %v591, %v755
        %v788 = vsub.f32 %v592, %v756
        %v789 = vsub.f32 %v593, %v757
        %v790 = vsub.f32 %v594, %v758
        %v791 = vsub.f32 %v595, %v759
        %v792 = vsub.f32 %v596, %v760
        %v793 = vsub.f32 %v597, %v761
        %v794 = vsub.f32 %v598, %v762
        %v795 = vsub.f32 %v599, %v763
        %v796 = vsub.f32 %v600, %v764
        %v797 = vadd.f32 %v765, %v259
        %v798 = vadd.f32 %v766, %v260
        %v799 = vadd.f32 %v767, %v261
        %v800 = vadd.f32 %v768, %v262
        %v801 = vadd.f32 %v769, %v263
        %v802 = vadd.f32 %v770, %v264
        %v803 = vadd.f32 %v771, %v265
        %v804 = vadd.f32 %v772, %v266
        %v805 = vadd.f32 %v773, %v267
        %v806 = vadd.f32 %v774, %v268
        %v807 = vadd.f32 %v775, %v269
        %v808 = vadd.f32 %v776, %v270
        %v809 = vadd.f32 %v777, %v271
        %v810 = vadd.f32 %v778, %v272
        %v811 = vadd.f32 %v779, %v273
        %v812 = vadd.f32 %v780, %v274
        %v813 = vadd.f32 %v781, %v275
        %v814 = vadd.f32 %v782, %v276
        %v815 = vadd.f32 %v783, %v277
        %v816 = vadd.f32 %v784, %v278
        %v817 = vadd.f32 %v785, %v279
        %v818 = vadd.f32 %v786, %v280
        %v819 = vadd.f32 %v787, %v281
        %v820 = vadd.f32 %v788, %v282
        %v821 = vadd.f32 %v789, %v283
        %v822 = vadd.f32 %v790, %v284
        %v823 = vadd.f32 %v791, %v285
        %v824 = vadd.f32 %v792, %v286
        %v825 = vadd.f32 %v793, %v287
        %v826 = vadd.f32 %v794, %v288
        %v827 = vadd.f32 %v795, %v289
        %v828 = vadd.f32 %v796, %v290
        %829 = vst [vmem:[%s242] sm:$0xff] %v797
        %830 = vst [vmem:[%s242 + $0x8] sm:$0xff] %v798
        %831 = vst [vmem:[%s242 + $0x10] sm:$0xff] %v799
        %832 = vst [vmem:[%s242 + $0x18] sm:$0xff] %v800
        %833 = vst [vmem:[%s242 + $0x20] sm:$0xff] %v801
        %834 = vst [vmem:[%s242 + $0x28] sm:$0xff] %v802
        %835 = vst [vmem:[%s242 + $0x30] sm:$0xff] %v803
        %836 = vst [vmem:[%s242 + $0x38] sm:$0xff] %v804
        %837 = vst [vmem:[%s242 + $0x40] sm:$0xff] %v805
        %838 = vst [vmem:[%s242 + $0x48] sm:$0xff] %v806
        %839 = vst [vmem:[%s242 + $0x50] sm:$0xff] %v807
        %840 = vst [vmem:[%s242 + $0x58] sm:$0xff] %v808
        %841 = vst [vmem:[%s242 + $0x60] sm:$0xff] %v809
        %842 = vst [vmem:[%s242 + $0x68] sm:$0xff] %v810
        %843 = vst [vmem:[%s242 + $0x70] sm:$0xff] %v811
        %844 = vst [vmem:[%s242 + $0x78] sm:$0xff] %v812
        %845 = vst [vmem:[%s242 + $0x80] sm:$0xff] %v813
        %846 = vst [vmem:[%s242 + $0x88] sm:$0xff] %v814
        %847 = vst [vmem:[%s242 + $0x90] sm:$0xff] %v815
        %848 = vst [vmem:[%s242 + $0x98] sm:$0xff] %v816
        %849 = vst [vmem:[%s242 + $0xa0] sm:$0xff] %v817
        %850 = vst [vmem:[%s242 + $0xa8] sm:$0xff] %v818
        %851 = vst [vmem:[%s242 + $0xb0] sm:$0xff] %v819
        %852 = vst [vmem:[%s242 + $0xb8] sm:$0xff] %v820
        %853 = vst [vmem:[%s242 + $0xc0] sm:$0xff] %v821
        %854 = vst [vmem:[%s242 + $0xc8] sm:$0xff] %v822
        %855 = vst [vmem:[%s242 + $0xd0] sm:$0xff] %v823
        %856 = vst [vmem:[%s242 + $0xd8] sm:$0xff] %v824
        %857 = vst [vmem:[%s242 + $0xe0] sm:$0xff] %v825
        %858 = vst [vmem:[%s242 + $0xe8] sm:$0xff] %v826
        %859 = vst [vmem:[%s242 + $0xf0] sm:$0xff] %v827
        %860 = vst [vmem:[%s242 + $0xf8] sm:$0xff] %v828
        %s861 = scalar_lea.vmem %s208, 256 [#allocation2]
        %v862 = vld [vmem:[%s861] sm:$0xff]
        %v863 = vld [vmem:[%s861 + $0x8] sm:$0xff]
        %v864 = vld [vmem:[%s861 + $0x10] sm:$0xff]
        %v865 = vld [vmem:[%s861 + $0x18] sm:$0xff]
        %v866 = vld [vmem:[%s861 + $0x20] sm:$0xff]
        %v867 = vld [vmem:[%s861 + $0x28] sm:$0xff]
        %v868 = vld [vmem:[%s861 + $0x30] sm:$0xff]
        %v869 = vld [vmem:[%s861 + $0x38] sm:$0xff]
        %v870 = vld [vmem:[%s861 + $0x40] sm:$0xff]
        %v871 = vld [vmem:[%s861 + $0x48] sm:$0xff]
        %v872 = vld [vmem:[%s861 + $0x50] sm:$0xff]
        %v873 = vld [vmem:[%s861 + $0x58] sm:$0xff]
        %v874 = vld [vmem:[%s861 + $0x60] sm:$0xff]
        %v875 = vld [vmem:[%s861 + $0x68] sm:$0xff]
        %v876 = vld [vmem:[%s861 + $0x70] sm:$0xff]
        %v877 = vld [vmem:[%s861 + $0x78] sm:$0xff]
        %v878 = vld [vmem:[%s861 + $0x80] sm:$0xff]
        %v879 = vld [vmem:[%s861 + $0x88] sm:$0xff]
        %v880 = vld [vmem:[%s861 + $0x90] sm:$0xff]
        %v881 = vld [vmem:[%s861 + $0x98] sm:$0xff]
        %v882 = vld [vmem:[%s861 + $0xa0] sm:$0xff]
        %v883 = vld [vmem:[%s861 + $0xa8] sm:$0xff]
        %v884 = vld [vmem:[%s861 + $0xb0] sm:$0xff]
        %v885 = vld [vmem:[%s861 + $0xb8] sm:$0xff]
        %v886 = vld [vmem:[%s861 + $0xc0] sm:$0xff]
        %v887 = vld [vmem:[%s861 + $0xc8] sm:$0xff]
        %v888 = vld [vmem:[%s861 + $0xd0] sm:$0xff]
        %v889 = vld [vmem:[%s861 + $0xd8] sm:$0xff]
        %v890 = vld [vmem:[%s861 + $0xe0] sm:$0xff]
        %v891 = vld [vmem:[%s861 + $0xe8] sm:$0xff]
        %v892 = vld [vmem:[%s861 + $0xf0] sm:$0xff]
        %v893 = vld [vmem:[%s861 + $0xf8] sm:$0xff]
        %s894 = scalar_lea.vmem %s248, 4
        %v895 = vld [vmem:[%s894] sm:$0xf]
        %v898 = vunpack.c.l.s4 1983009808
        %v899 = vunpack.c.0.s8 %v898
        %v900 = vlaneseq
        %v901 = vshrl.u32 %v900, 7
        %v902 = vsub.s32 %v899, %v901
        %v903 = vrot.slane %v895, %v902
        %v904 = vcombine.high %v903, %v903
        %907 = vmatprep.subr.mxu0 0.0
        %908 = vmatpush1.msra.mxu0 %v862
        %909 = vmatprep.subr.mxu0 0.0
        %910 = vmatpush1.msra.mxu0 %v863
        %911 = vmatprep.subr.mxu0 0.0
        %912 = vmatpush1.msra.mxu0 %v864
        %913 = vmatprep.subr.mxu0 0.0
        %914 = vmatpush1.msra.mxu0 %v865
        %915 = vmatprep.subr.mxu0 0.0
        %916 = vmatpush1.msra.mxu0 %v866
        %917 = vmatprep.subr.mxu0 0.0
        %918 = vmatpush1.msra.mxu0 %v867
        %919 = vmatprep.subr.mxu0 0.0
        %920 = vmatpush1.msra.mxu0 %v868
        %921 = vmatprep.subr.mxu0 0.0
        %922 = vmatpush1.msra.mxu0 %v869
        %923 = vmatprep.subr.mxu0 0.0
        %924 = vmatpush1.msra.mxu0 %v870
        %925 = vmatprep.subr.mxu0 0.0
        %926 = vmatpush1.msra.mxu0 %v871
        %927 = vmatprep.subr.mxu0 0.0
        %928 = vmatpush1.msra.mxu0 %v872
        %929 = vmatprep.subr.mxu0 0.0
        %930 = vmatpush1.msra.mxu0 %v873
        %931 = vmatprep.subr.mxu0 0.0
        %932 = vmatpush1.msra.mxu0 %v874
        %933 = vmatprep.subr.mxu0 0.0
        %934 = vmatpush1.msra.mxu0 %v875
        %935 = vmatprep.subr.mxu0 0.0
        %936 = vmatpush1.msra.mxu0 %v876
        %937 = vmatprep.subr.mxu0 0.0
        %938 = vmatpush1.msra.mxu0 %v877
        %939 = vmatprep.subr.mxu0 0.0
        %940 = vmatpush1.msra.mxu0 %v878
        %941 = vmatprep.subr.mxu0 0.0
        %942 = vmatpush1.msra.mxu0 %v879
        %943 = vmatprep.subr.mxu0 0.0
        %944 = vmatpush1.msra.mxu0 %v880
        %945 = vmatprep.subr.mxu0 0.0
        %946 = vmatpush1.msra.mxu0 %v881
        %947 = vmatprep.subr.mxu0 0.0
        %948 = vmatpush1.msra.mxu0 %v882
        %949 = vmatprep.subr.mxu0 0.0
        %950 = vmatpush1.msra.mxu0 %v883
        %951 = vmatprep.subr.mxu0 0.0
        %952 = vmatpush1.msra.mxu0 %v884
        %953 = vmatprep.subr.mxu0 0.0
        %954 = vmatpush1.msra.mxu0 %v885
        %955 = vmatprep.subr.mxu0 0.0
        %956 = vmatpush1.msra.mxu0 %v886
        %957 = vmatprep.subr.mxu0 0.0
        %958 = vmatpush1.msra.mxu0 %v887
        %959 = vmatprep.subr.mxu0 0.0
        %960 = vmatpush1.msra.mxu0 %v888
        %961 = vmatprep.subr.mxu0 0.0
        %962 = vmatpush1.msra.mxu0 %v889
        %963 = vmatprep.subr.mxu0 0.0
        %964 = vmatpush1.msra.mxu0 %v890
        %965 = vmatprep.subr.mxu0 0.0
        %966 = vmatpush1.msra.mxu0 %v891
        %967 = vmatprep.subr.mxu0 0.0
        %968 = vmatpush1.msra.mxu0 %v892
        %969 = vmatprep.subr.mxu0 0.0
        %970 = vmatpush1.msra.mxu0 %v893
        %971 = vmatprep.mubr.f32.mxu0 %v904
        %972 = vmatmul.mubr.f32.gmra.mrb[0].mxu0 %v903
        %v973 = vpop.f32.mrb[0].mxu0
        %v974 = vadd.f32 0.0, %v973
        %v975 = vpop.f32.mrb[0].mxu0
        %976 = vdwg.mxu0
        %s977 = scalar_lea.vmem %s255, 256
        %v978 = vld [vmem:[%s977] sm:$0xff]
        %v979 = vld [vmem:[%s977 + $0x8] sm:$0xff]
        %v980 = vld [vmem:[%s977 + $0x10] sm:$0xff]
        %v981 = vld [vmem:[%s977 + $0x18] sm:$0xff]
        %v982 = vld [vmem:[%s977 + $0x20] sm:$0xff]
        %v983 = vld [vmem:[%s977 + $0x28] sm:$0xff]
        %v984 = vld [vmem:[%s977 + $0x30] sm:$0xff]
        %v985 = vld [vmem:[%s977 + $0x38] sm:$0xff]
        %v986 = vld [vmem:[%s977 + $0x40] sm:$0xff]
        %v987 = vld [vmem:[%s977 + $0x48] sm:$0xff]
        %v988 = vld [vmem:[%s977 + $0x50] sm:$0xff]
        %v989 = vld [vmem:[%s977 + $0x58] sm:$0xff]
        %v990 = vld [vmem:[%s977 + $0x60] sm:$0xff]
        %v991 = vld [vmem:[%s977 + $0x68] sm:$0xff]
        %v992 = vld [vmem:[%s977 + $0x70] sm:$0xff]
        %v993 = vld [vmem:[%s977 + $0x78] sm:$0xff]
        %v994 = vld [vmem:[%s977 + $0x80] sm:$0xff]
        %v995 = vld [vmem:[%s977 + $0x88] sm:$0xff]
        %v996 = vld [vmem:[%s977 + $0x90] sm:$0xff]
        %v997 = vld [vmem:[%s977 + $0x98] sm:$0xff]
        %v998 = vld [vmem:[%s977 + $0xa0] sm:$0xff]
        %v999 = vld [vmem:[%s977 + $0xa8] sm:$0xff]
        %v1000 = vld [vmem:[%s977 + $0xb0] sm:$0xff]
        %v1001 = vld [vmem:[%s977 + $0xb8] sm:$0xff]
        %v1002 = vld [vmem:[%s977 + $0xc0] sm:$0xff]
        %v1003 = vld [vmem:[%s977 + $0xc8] sm:$0xff]
        %v1004 = vld [vmem:[%s977 + $0xd0] sm:$0xff]
        %v1005 = vld [vmem:[%s977 + $0xd8] sm:$0xff]
        %v1006 = vld [vmem:[%s977 + $0xe0] sm:$0xff]
        %v1007 = vld [vmem:[%s977 + $0xe8] sm:$0xff]
        %v1008 = vld [vmem:[%s977 + $0xf0] sm:$0xff]
        %v1009 = vld [vmem:[%s977 + $0xf8] sm:$0xff]
        %1011 = vset.pattern.permute.xlu0 0
        %1012 = vperm.xlu0 %1011, %v978
        %v1013 = vpop.permute.xlu0 %1012
        %1016 = vset.pattern.permute.xlu0 0
        %1017 = vperm.xlu0 %1016, %v979
        %v1018 = vpop.permute.xlu0 %1017
        %1021 = vset.pattern.permute.xlu0 0
        %1022 = vperm.xlu0 %1021, %v980
        %v1023 = vpop.permute.xlu0 %1022
        %1026 = vset.pattern.permute.xlu0 0
        %1027 = vperm.xlu0 %1026, %v981
        %v1028 = vpop.permute.xlu0 %1027
        %1031 = vset.pattern.permute.xlu0 0
        %1032 = vperm.xlu0 %1031, %v982
        %v1033 = vpop.permute.xlu0 %1032
        %1036 = vset.pattern.permute.xlu0 0
        %1037 = vperm.xlu0 %1036, %v983
        %v1038 = vpop.permute.xlu0 %1037
        %1041 = vset.pattern.permute.xlu0 0
        %1042 = vperm.xlu0 %1041, %v984
        %v1043 = vpop.permute.xlu0 %1042
        %1046 = vset.pattern.permute.xlu0 0
        %1047 = vperm.xlu0 %1046, %v985
        %v1048 = vpop.permute.xlu0 %1047
        %1051 = vset.pattern.permute.xlu0 0
        %1052 = vperm.xlu0 %1051, %v986
        %v1053 = vpop.permute.xlu0 %1052
        %1056 = vset.pattern.permute.xlu0 0
        %1057 = vperm.xlu0 %1056, %v987
        %v1058 = vpop.permute.xlu0 %1057
        %1061 = vset.pattern.permute.xlu0 0
        %1062 = vperm.xlu0 %1061, %v988
        %v1063 = vpop.permute.xlu0 %1062
        %1066 = vset.pattern.permute.xlu0 0
        %1067 = vperm.xlu0 %1066, %v989
        %v1068 = vpop.permute.xlu0 %1067
        %1071 = vset.pattern.permute.xlu0 0
        %1072 = vperm.xlu0 %1071, %v990
        %v1073 = vpop.permute.xlu0 %1072
        %1076 = vset.pattern.permute.xlu0 0
        %1077 = vperm.xlu0 %1076, %v991
        %v1078 = vpop.permute.xlu0 %1077
        %1081 = vset.pattern.permute.xlu0 0
        %1082 = vperm.xlu0 %1081, %v992
        %v1083 = vpop.permute.xlu0 %1082
        %1086 = vset.pattern.permute.xlu0 0
        %1087 = vperm.xlu0 %1086, %v993
        %v1088 = vpop.permute.xlu0 %1087
        %1091 = vset.pattern.permute.xlu0 0
        %1092 = vperm.xlu0 %1091, %v994
        %v1093 = vpop.permute.xlu0 %1092
        %1096 = vset.pattern.permute.xlu0 0
        %1097 = vperm.xlu0 %1096, %v995
        %v1098 = vpop.permute.xlu0 %1097
        %1101 = vset.pattern.permute.xlu0 0
        %1102 = vperm.xlu0 %1101, %v996
        %v1103 = vpop.permute.xlu0 %1102
        %1106 = vset.pattern.permute.xlu0 0
        %1107 = vperm.xlu0 %1106, %v997
        %v1108 = vpop.permute.xlu0 %1107
        %1111 = vset.pattern.permute.xlu0 0
        %1112 = vperm.xlu0 %1111, %v998
        %v1113 = vpop.permute.xlu0 %1112
        %1116 = vset.pattern.permute.xlu0 0
        %1117 = vperm.xlu0 %1116, %v999
        %v1118 = vpop.permute.xlu0 %1117
        %1121 = vset.pattern.permute.xlu0 0
        %1122 = vperm.xlu0 %1121, %v1000
        %v1123 = vpop.permute.xlu0 %1122
        %1126 = vset.pattern.permute.xlu0 0
        %1127 = vperm.xlu0 %1126, %v1001
        %v1128 = vpop.permute.xlu0 %1127
        %1131 = vset.pattern.permute.xlu0 0
        %1132 = vperm.xlu0 %1131, %v1002
        %v1133 = vpop.permute.xlu0 %1132
        %1136 = vset.pattern.permute.xlu0 0
        %1137 = vperm.xlu0 %1136, %v1003
        %v1138 = vpop.permute.xlu0 %1137
        %1141 = vset.pattern.permute.xlu0 0
        %1142 = vperm.xlu0 %1141, %v1004
        %v1143 = vpop.permute.xlu0 %1142
        %1146 = vset.pattern.permute.xlu0 0
        %1147 = vperm.xlu0 %1146, %v1005
        %v1148 = vpop.permute.xlu0 %1147
        %1151 = vset.pattern.permute.xlu0 0
        %1152 = vperm.xlu0 %1151, %v1006
        %v1153 = vpop.permute.xlu0 %1152
        %1156 = vset.pattern.permute.xlu0 0
        %1157 = vperm.xlu0 %1156, %v1007
        %v1158 = vpop.permute.xlu0 %1157
        %1161 = vset.pattern.permute.xlu0 0
        %1162 = vperm.xlu0 %1161, %v1008
        %v1163 = vpop.permute.xlu0 %1162
        %1166 = vset.pattern.permute.xlu0 0
        %1167 = vperm.xlu0 %1166, %v1009
        %v1168 = vpop.permute.xlu0 %1167
        %v1170 = vlaneseq
        %v1171 = vshrl.u32 %v1170, 7
        %v1172 = vsub.s32 0, %v1171
        %v1173 = vrot.slane %v974, %v1172
        %v1174 = vmul.f32 %v1013, %v1173
        %v1175 = vmul.f32 %v1018, %v1173
        %v1176 = vmul.f32 %v1023, %v1173
        %v1177 = vmul.f32 %v1028, %v1173
        %v1178 = vmul.f32 %v1033, %v1173
        %v1179 = vmul.f32 %v1038, %v1173
        %v1180 = vmul.f32 %v1043, %v1173
        %v1181 = vmul.f32 %v1048, %v1173
        %v1182 = vmul.f32 %v1053, %v1173
        %v1183 = vmul.f32 %v1058, %v1173
        %v1184 = vmul.f32 %v1063, %v1173
        %v1185 = vmul.f32 %v1068, %v1173
        %v1186 = vmul.f32 %v1073, %v1173
        %v1187 = vmul.f32 %v1078, %v1173
        %v1188 = vmul.f32 %v1083, %v1173
        %v1189 = vmul.f32 %v1088, %v1173
        %v1190 = vmul.f32 %v1093, %v1173
        %v1191 = vmul.f32 %v1098, %v1173
        %v1192 = vmul.f32 %v1103, %v1173
        %v1193 = vmul.f32 %v1108, %v1173
        %v1194 = vmul.f32 %v1113, %v1173
        %v1195 = vmul.f32 %v1118, %v1173
        %v1196 = vmul.f32 %v1123, %v1173
        %v1197 = vmul.f32 %v1128, %v1173
        %v1198 = vmul.f32 %v1133, %v1173
        %v1199 = vmul.f32 %v1138, %v1173
        %v1200 = vmul.f32 %v1143, %v1173
        %v1201 = vmul.f32 %v1148, %v1173
        %v1202 = vmul.f32 %v1153, %v1173
        %v1203 = vmul.f32 %v1158, %v1173
        %v1204 = vmul.f32 %v1163, %v1173
        %v1205 = vmul.f32 %v1168, %v1173
        %1206 = vset.pattern.permute.xlu0 1
        %1207 = vperm.xlu0 %1206, %v978
        %v1208 = vpop.permute.xlu0 %1207
        %1210 = vset.pattern.permute.xlu0 1
        %1211 = vperm.xlu0 %1210, %v979
        %v1212 = vpop.permute.xlu0 %1211
        %1214 = vset.pattern.permute.xlu0 1
        %1215 = vperm.xlu0 %1214, %v980
        %v1216 = vpop.permute.xlu0 %1215
        %1218 = vset.pattern.permute.xlu0 1
        %1219 = vperm.xlu0 %1218, %v981
        %v1220 = vpop.permute.xlu0 %1219
        %1222 = vset.pattern.permute.xlu0 1
        %1223 = vperm.xlu0 %1222, %v982
        %v1224 = vpop.permute.xlu0 %1223
        %1226 = vset.pattern.permute.xlu0 1
        %1227 = vperm.xlu0 %1226, %v983
        %v1228 = vpop.permute.xlu0 %1227
        %1230 = vset.pattern.permute.xlu0 1
        %1231 = vperm.xlu0 %1230, %v984
        %v1232 = vpop.permute.xlu0 %1231
        %1234 = vset.pattern.permute.xlu0 1
        %1235 = vperm.xlu0 %1234, %v985
        %v1236 = vpop.permute.xlu0 %1235
        %1238 = vset.pattern.permute.xlu0 1
        %1239 = vperm.xlu0 %1238, %v986
        %v1240 = vpop.permute.xlu0 %1239
        %1242 = vset.pattern.permute.xlu0 1
        %1243 = vperm.xlu0 %1242, %v987
        %v1244 = vpop.permute.xlu0 %1243
        %1246 = vset.pattern.permute.xlu0 1
        %1247 = vperm.xlu0 %1246, %v988
        %v1248 = vpop.permute.xlu0 %1247
        %1250 = vset.pattern.permute.xlu0 1
        %1251 = vperm.xlu0 %1250, %v989
        %v1252 = vpop.permute.xlu0 %1251
        %1254 = vset.pattern.permute.xlu0 1
        %1255 = vperm.xlu0 %1254, %v990
        %v1256 = vpop.permute.xlu0 %1255
        %1258 = vset.pattern.permute.xlu0 1
        %1259 = vperm.xlu0 %1258, %v991
        %v1260 = vpop.permute.xlu0 %1259
        %1262 = vset.pattern.permute.xlu0 1
        %1263 = vperm.xlu0 %1262, %v992
        %v1264 = vpop.permute.xlu0 %1263
        %1266 = vset.pattern.permute.xlu0 1
        %1267 = vperm.xlu0 %1266, %v993
        %v1268 = vpop.permute.xlu0 %1267
        %1270 = vset.pattern.permute.xlu0 1
        %1271 = vperm.xlu0 %1270, %v994
        %v1272 = vpop.permute.xlu0 %1271
        %1274 = vset.pattern.permute.xlu0 1
        %1275 = vperm.xlu0 %1274, %v995
        %v1276 = vpop.permute.xlu0 %1275
        %1278 = vset.pattern.permute.xlu0 1
        %1279 = vperm.xlu0 %1278, %v996
        %v1280 = vpop.permute.xlu0 %1279
        %1282 = vset.pattern.permute.xlu0 1
        %1283 = vperm.xlu0 %1282, %v997
        %v1284 = vpop.permute.xlu0 %1283
        %1286 = vset.pattern.permute.xlu0 1
        %1287 = vperm.xlu0 %1286, %v998
        %v1288 = vpop.permute.xlu0 %1287
        %1290 = vset.pattern.permute.xlu0 1
        %1291 = vperm.xlu0 %1290, %v999
        %v1292 = vpop.permute.xlu0 %1291
        %1294 = vset.pattern.permute.xlu0 1
        %1295 = vperm.xlu0 %1294, %v1000
        %v1296 = vpop.permute.xlu0 %1295
        %1298 = vset.pattern.permute.xlu0 1
        %1299 = vperm.xlu0 %1298, %v1001
        %v1300 = vpop.permute.xlu0 %1299
        %1302 = vset.pattern.permute.xlu0 1
        %1303 = vperm.xlu0 %1302, %v1002
        %v1304 = vpop.permute.xlu0 %1303
        %1306 = vset.pattern.permute.xlu0 1
        %1307 = vperm.xlu0 %1306, %v1003
        %v1308 = vpop.permute.xlu0 %1307
        %1310 = vset.pattern.permute.xlu0 1
        %1311 = vperm.xlu0 %1310, %v1004
        %v1312 = vpop.permute.xlu0 %1311
        %1314 = vset.pattern.permute.xlu0 1
        %1315 = vperm.xlu0 %1314, %v1005
        %v1316 = vpop.permute.xlu0 %1315
        %1318 = vset.pattern.permute.xlu0 1
        %1319 = vperm.xlu0 %1318, %v1006
        %v1320 = vpop.permute.xlu0 %1319
        %1322 = vset.pattern.permute.xlu0 1
        %1323 = vperm.xlu0 %1322, %v1007
        %v1324 = vpop.permute.xlu0 %1323
        %1326 = vset.pattern.permute.xlu0 1
        %1327 = vperm.xlu0 %1326, %v1008
        %v1328 = vpop.permute.xlu0 %1327
        %1330 = vset.pattern.permute.xlu0 1
        %1331 = vperm.xlu0 %1330, %v1009
        %v1332 = vpop.permute.xlu0 %1331
        %v1334 = vlaneseq
        %v1335 = vshrl.u32 %v1334, 7
        %v1336 = vsub.s32 1, %v1335
        %v1337 = vrot.slane %v974, %v1336
        %v1338 = vmul.f32 %v1208, %v1337
        %v1339 = vmul.f32 %v1212, %v1337
        %v1340 = vmul.f32 %v1216, %v1337
        %v1341 = vmul.f32 %v1220, %v1337
        %v1342 = vmul.f32 %v1224, %v1337
        %v1343 = vmul.f32 %v1228, %v1337
        %v1344 = vmul.f32 %v1232, %v1337
        %v1345 = vmul.f32 %v1236, %v1337
        %v1346 = vmul.f32 %v1240, %v1337
        %v1347 = vmul.f32 %v1244, %v1337
        %v1348 = vmul.f32 %v1248, %v1337
        %v1349 = vmul.f32 %v1252, %v1337
        %v1350 = vmul.f32 %v1256, %v1337
        %v1351 = vmul.f32 %v1260, %v1337
        %v1352 = vmul.f32 %v1264, %v1337
        %v1353 = vmul.f32 %v1268, %v1337
        %v1354 = vmul.f32 %v1272, %v1337
        %v1355 = vmul.f32 %v1276, %v1337
        %v1356 = vmul.f32 %v1280, %v1337
        %v1357 = vmul.f32 %v1284, %v1337
        %v1358 = vmul.f32 %v1288, %v1337
        %v1359 = vmul.f32 %v1292, %v1337
        %v1360 = vmul.f32 %v1296, %v1337
        %v1361 = vmul.f32 %v1300, %v1337
        %v1362 = vmul.f32 %v1304, %v1337
        %v1363 = vmul.f32 %v1308, %v1337
        %v1364 = vmul.f32 %v1312, %v1337
        %v1365 = vmul.f32 %v1316, %v1337
        %v1366 = vmul.f32 %v1320, %v1337
        %v1367 = vmul.f32 %v1324, %v1337
        %v1368 = vmul.f32 %v1328, %v1337
        %v1369 = vmul.f32 %v1332, %v1337
        %v1370 = vsub.f32 %v1174, %v1338
        %v1371 = vsub.f32 %v1175, %v1339
        %v1372 = vsub.f32 %v1176, %v1340
        %v1373 = vsub.f32 %v1177, %v1341
        %v1374 = vsub.f32 %v1178, %v1342
        %v1375 = vsub.f32 %v1179, %v1343
        %v1376 = vsub.f32 %v1180, %v1344
        %v1377 = vsub.f32 %v1181, %v1345
        %v1378 = vsub.f32 %v1182, %v1346
        %v1379 = vsub.f32 %v1183, %v1347
        %v1380 = vsub.f32 %v1184, %v1348
        %v1381 = vsub.f32 %v1185, %v1349
        %v1382 = vsub.f32 %v1186, %v1350
        %v1383 = vsub.f32 %v1187, %v1351
        %v1384 = vsub.f32 %v1188, %v1352
        %v1385 = vsub.f32 %v1189, %v1353
        %v1386 = vsub.f32 %v1190, %v1354
        %v1387 = vsub.f32 %v1191, %v1355
        %v1388 = vsub.f32 %v1192, %v1356
        %v1389 = vsub.f32 %v1193, %v1357
        %v1390 = vsub.f32 %v1194, %v1358
        %v1391 = vsub.f32 %v1195, %v1359
        %v1392 = vsub.f32 %v1196, %v1360
        %v1393 = vsub.f32 %v1197, %v1361
        %v1394 = vsub.f32 %v1198, %v1362
        %v1395 = vsub.f32 %v1199, %v1363
        %v1396 = vsub.f32 %v1200, %v1364
        %v1397 = vsub.f32 %v1201, %v1365
        %v1398 = vsub.f32 %v1202, %v1366
        %v1399 = vsub.f32 %v1203, %v1367
        %v1400 = vsub.f32 %v1204, %v1368
        %v1401 = vsub.f32 %v1205, %v1369
        %v1402 = vadd.f32 %v1370, %v862
        %v1403 = vadd.f32 %v1371, %v863
        %v1404 = vadd.f32 %v1372, %v864
        %v1405 = vadd.f32 %v1373, %v865
        %v1406 = vadd.f32 %v1374, %v866
        %v1407 = vadd.f32 %v1375, %v867
        %v1408 = vadd.f32 %v1376, %v868
        %v1409 = vadd.f32 %v1377, %v869
        %v1410 = vadd.f32 %v1378, %v870
        %v1411 = vadd.f32 %v1379, %v871
        %v1412 = vadd.f32 %v1380, %v872
        %v1413 = vadd.f32 %v1381, %v873
        %v1414 = vadd.f32 %v1382, %v874
        %v1415 = vadd.f32 %v1383, %v875
        %v1416 = vadd.f32 %v1384, %v876
        %v1417 = vadd.f32 %v1385, %v877
        %v1418 = vadd.f32 %v1386, %v878
        %v1419 = vadd.f32 %v1387, %v879
        %v1420 = vadd.f32 %v1388, %v880
        %v1421 = vadd.f32 %v1389, %v881
        %v1422 = vadd.f32 %v1390, %v882
        %v1423 = vadd.f32 %v1391, %v883
        %v1424 = vadd.f32 %v1392, %v884
        %v1425 = vadd.f32 %v1393, %v885
        %v1426 = vadd.f32 %v1394, %v886
        %v1427 = vadd.f32 %v1395, %v887
        %v1428 = vadd.f32 %v1396, %v888
        %v1429 = vadd.f32 %v1397, %v889
        %v1430 = vadd.f32 %v1398, %v890
        %v1431 = vadd.f32 %v1399, %v891
        %v1432 = vadd.f32 %v1400, %v892
        %v1433 = vadd.f32 %v1401, %v893
        %s1434 = scalar_lea.vmem %s242, 256 [#allocation5]
        %1435 = vst [vmem:[%s1434] sm:$0xff] %v1402
        %1436 = vst [vmem:[%s1434 + $0x8] sm:$0xff] %v1403
        %1437 = vst [vmem:[%s1434 + $0x10] sm:$0xff] %v1404
        %1438 = vst [vmem:[%s1434 + $0x18] sm:$0xff] %v1405
        %1439 = vst [vmem:[%s1434 + $0x20] sm:$0xff] %v1406
        %1440 = vst [vmem:[%s1434 + $0x28] sm:$0xff] %v1407
        %1441 = vst [vmem:[%s1434 + $0x30] sm:$0xff] %v1408
        %1442 = vst [vmem:[%s1434 + $0x38] sm:$0xff] %v1409
        %1443 = vst [vmem:[%s1434 + $0x40] sm:$0xff] %v1410
        %1444 = vst [vmem:[%s1434 + $0x48] sm:$0xff] %v1411
        %1445 = vst [vmem:[%s1434 + $0x50] sm:$0xff] %v1412
        %1446 = vst [vmem:[%s1434 + $0x58] sm:$0xff] %v1413
        %1447 = vst [vmem:[%s1434 + $0x60] sm:$0xff] %v1414
        %1448 = vst [vmem:[%s1434 + $0x68] sm:$0xff] %v1415
        %1449 = vst [vmem:[%s1434 + $0x70] sm:$0xff] %v1416
        %1450 = vst [vmem:[%s1434 + $0x78] sm:$0xff] %v1417
        %1451 = vst [vmem:[%s1434 + $0x80] sm:$0xff] %v1418
        %1452 = vst [vmem:[%s1434 + $0x88] sm:$0xff] %v1419
        %1453 = vst [vmem:[%s1434 + $0x90] sm:$0xff] %v1420
        %1454 = vst [vmem:[%s1434 + $0x98] sm:$0xff] %v1421
        %1455 = vst [vmem:[%s1434 + $0xa0] sm:$0xff] %v1422
        %1456 = vst [vmem:[%s1434 + $0xa8] sm:$0xff] %v1423
        %1457 = vst [vmem:[%s1434 + $0xb0] sm:$0xff] %v1424
        %1458 = vst [vmem:[%s1434 + $0xb8] sm:$0xff] %v1425
        %1459 = vst [vmem:[%s1434 + $0xc0] sm:$0xff] %v1426
        %1460 = vst [vmem:[%s1434 + $0xc8] sm:$0xff] %v1427
        %1461 = vst [vmem:[%s1434 + $0xd0] sm:$0xff] %v1428
        %1462 = vst [vmem:[%s1434 + $0xd8] sm:$0xff] %v1429
        %1463 = vst [vmem:[%s1434 + $0xe0] sm:$0xff] %v1430
        %1464 = vst [vmem:[%s1434 + $0xe8] sm:$0xff] %v1431
        %1465 = vst [vmem:[%s1434 + $0xf0] sm:$0xff] %v1432
        %1466 = vst [vmem:[%s1434 + $0xf8] sm:$0xff] %v1433
        %s1467 = sand.u32 %s122, 1
        %s1468 = scalar_lea.sflag [#allocation4], %s1467
        %s1469 = sand.u32 %s122, 1
        %s1470 = smul.addr %s1469, 512
        %s1471 = scalar_lea.vmem [#allocation5], %s1470
        // Predicated region
        $region37: #{tpu_custom_call.1} parent=31 // pred_check
          %p1472 = pneg %p132
        $region38: #{tpu_custom_call.1} parent=31 // pred_check_branch
          %1474 = sbr.rel (%p1472) target = $region40
        $region39: #{tpu_custom_call.1} parent=31 // pred_region
          %s1475 = smul.u32 2, %s24
          %s1477 = ssub.s32 8192, 8192
          %1478 = vsyncadd %s1468, %s1477
          %s1479 = smul.addr %s1475, 64
          %s1480 = sadd.s32 %s25, %s1479
          %s1481 = smul.addr %s1480, 128
          %s1482 = scalar_lea.hbm %s3, %s1481
          %s1483 = sshll.u32 %s1471, 4
          %s1484 = int_to_ptr.vmem [resolvable:$true] %s1483
          %1489 = dma.vmem_to_hbm [thread:$0]  %s1484, 8192, %s1482, %s1468, 128, 256, 8
        $region40: #{tpu_custom_call.1} parent=31 // pred_fallthru
          _
      $region32: #{tpu_custom_call.1} parent=5 // pred_fallthru
        _
      %p1490 = scmp.le.s32.totalorder 2, %s15
      // Predicated region
      $region41: #{tpu_custom_call.1} parent=5 // pred_check
        %p1491 = pneg %p1490
      $region42: #{tpu_custom_call.1} parent=5 // pred_check_branch
        %1493 = sbr.rel (%p1491) target = $region44
      $region43: #{tpu_custom_call.1} parent=5 // pred_region
        %s1494 = ssub.s32 %s15, 2
        // Predicated region
        $region45: #{tpu_custom_call.1} parent=43 // pred_check
          %p1495 = pneg %p138
        $region46: #{tpu_custom_call.1} parent=43 // pred_check_branch
          %1497 = sbr.rel (%p1495) target = $region48
        $region47: #{tpu_custom_call.1} parent=43 // pred_region
          %s1498 = sand.u32 %s123, 1
          %s1499 = scalar_lea.sflag [#allocation4], %s1498
          %s1500 = sand.u32 %s123, 1
          %s1501 = smul.addr %s1500, 512
          %s1502 = scalar_lea.vmem [#allocation5], %s1501
          %1503 = dma.done %s1499, 8192
        $region48: #{tpu_custom_call.1} parent=43 // pred_fallthru
          _
      $region44: #{tpu_custom_call.1} parent=5 // pred_fallthru
        _
    $region6: #{tpu_custom_call.1} parent=1 // loop_footer
      %s19 = sadd.s32 1, %s15
    $region7: #{tpu_custom_call.1} parent=1 // loop_footer_branch
      %14 = sbr.rel target = $region3
    $region8: #{tpu_custom_call.1} parent=1 // loop_exit
      _
    %1504 = vsyncpa [#allocation3], 1
    %s1505 = scalar_lea.sflag [#allocation3], 1
    %1506 = vsyncpa %s1505, 1
    %1507 = vsyncpa [#allocation4], 1
    %s1508 = scalar_lea.sflag [#allocation4], 1
    %1509 = vsyncpa %s1508, 1

</llo_original>
